<compile_context>
chip_gen: v7x
topology: tpu7x:2x2x1
jax: 0.10.0
libtpu: 0.0.40
codegen_flags: <defaults>
</compile_context>

<pallas_src>
import functools

import jax
import jax.numpy as jnp
from jax.experimental import pallas as pl
from jax.experimental.pallas import tpu as pltpu

N_STATES = 4            # CartPole-v1 observation dim
N_ACTIONS = 2           # CartPole-v1 action dim
HIDDEN = 50             # logical hidden width (matches the PyTorch module)

STATES_PAD = 8          # padded input features (sublane aligned)
HIDDEN_PAD = 128        # padded hidden width (full f32 lane tile)
ACTIONS_PAD = 8         # padded action rows (full sublane group for the store)

LANE = 128              # f32 lane tiling
DEFAULT_BLOCK_B = 2048  # batch columns per grid step (multiple of 128)


def _round_up(n, m):
    return ((n + m - 1) // m) * m


def _choose_batch_tile(batch, block_b):
    """Batch tile (lane axis): multiple of 128, <= block_b, and small enough
    that the grid has >= 2 steps whenever the batch permits (v7x megacore)."""
    block_b = _round_up(max(block_b, LANE), LANE)
    rounded = _round_up(max(batch, 1), LANE)
    tb = min(block_b, rounded)
    if rounded >= 2 * LANE:
        tb = min(tb, _round_up(rounded // 2, LANE))
    return tb


def _q_table_net_kernel(x_ref, w1_ref, b1_ref, w2_ref, b2_ref, w3_ref, b3_ref,
                        out_ref):
    # Everything is (features, batch); batch sits on the lane axis.
    x = x_ref[...]                                            # (STATES_PAD, TB)

    # Layer 1: Linear(4, 50) + ReLU        (MXU, K=8)
    h1 = jnp.dot(w1_ref[...], x, preferred_element_type=jnp.float32)
    h1 = jnp.maximum(h1 + b1_ref[...], 0.0)                   # (HIDDEN_PAD, TB)

    # Layer 2: Linear(50, 50) + ReLU       (MXU, 128x128 fill)
    h2 = jnp.dot(w2_ref[...], h1, preferred_element_type=jnp.float32)
    h2 = jnp.maximum(h2 + b2_ref[...], 0.0)                   # (HIDDEN_PAD, TB)

    # Layer 3: Linear(50, 2)               (MXU; rows 2..7 are zero padding)
    q = jnp.dot(w3_ref[...], h2, preferred_element_type=jnp.float32)
    out_ref[...] = (q + b3_ref[...]).astype(out_ref.dtype)    # (ACTIONS_PAD, TB)


@functools.partial(jax.jit, static_argnames=("block_b",))
def q_table_net_forward(x, padded_params, block_b=DEFAULT_BLOCK_B):
    """Fused MLP forward. x: (B, N_STATES) f32 -> (B, N_ACTIONS) f32."""
    w1, b1, w2, b2, w3, b3 = padded_params
    batch = x.shape[0]

    tb = _choose_batch_tile(batch, block_b)
    padded_batch = _round_up(batch, tb)
    nb = padded_batch // tb

    # Transposed, lane-dense input: (STATES_PAD, padded_batch).
    xt = jnp.zeros((STATES_PAD, padded_batch), jnp.float32)
    xt = xt.at[:N_STATES, :batch].set(x.T)

    # Weights/biases: full-array blocks with a constant index_map -> fetched
    # once and resident in VMEM across all grid steps.
    resident = lambda arr: pl.BlockSpec(arr.shape, lambda i: (0,) * arr.ndim)

    out_t = pl.pallas_call(
        _q_table_net_kernel,
        out_shape=jax.ShapeDtypeStruct((ACTIONS_PAD, padded_batch), jnp.float32),
        grid=(nb,),
        in_specs=[
            pl.BlockSpec((STATES_PAD, tb), lambda i: (0, i)),  # x streams
            resident(w1), resident(b1),
            resident(w2), resident(b2),
            resident(w3), resident(b3),
        ],
        out_specs=pl.BlockSpec((ACTIONS_PAD, tb), lambda i: (0, i)),
        compiler_params=pltpu.CompilerParams(
            dimension_semantics=("parallel",)),                # megacore shard
    )(xt, w1, b1, w2, b2, w3, b3)

    # (ACTIONS_PAD, padded_batch) -> (B, N_ACTIONS)
    return out_t[:N_ACTIONS, :batch].T


def init_params(key):
    """Logical (unpadded) parameters in PyTorch layout.

    Weights are (out_features, in_features), biases (out_features,), drawn
    from U(-1/sqrt(fan_in), 1/sqrt(fan_in)) like nn.Linear's default init.
    """
    ks = jax.random.split(key, 6)

    def uniform_init(k, shape, fan_in):
        bound = 1.0 / jnp.sqrt(jnp.float32(fan_in))
        return jax.random.uniform(k, shape, jnp.float32, -bound, bound)

    w1 = uniform_init(ks[0], (HIDDEN, N_STATES), N_STATES)
    b1 = uniform_init(ks[1], (HIDDEN,), N_STATES)
    w2 = uniform_init(ks[2], (HIDDEN, HIDDEN), HIDDEN)
    b2 = uniform_init(ks[3], (HIDDEN,), HIDDEN)
    w3 = uniform_init(ks[4], (N_ACTIONS, HIDDEN), HIDDEN)
    b3 = uniform_init(ks[5], (N_ACTIONS,), HIDDEN)
    return (w1, b1, w2, b2, w3, b3)


def pad_params(params):
    """Zero-pad to the transposed-network layout.

    Padding is all zeros, so the logical 4->50->50->2 results are unchanged
    (ReLU(0)=0 and zero weight rows/cols contribute nothing)."""
    w1, b1, w2, b2, w3, b3 = params
    w1p = jnp.zeros((HIDDEN_PAD, STATES_PAD), jnp.float32).at[:HIDDEN, :N_STATES].set(w1)
    b1p = jnp.zeros((HIDDEN_PAD, 1), jnp.float32).at[:HIDDEN, 0].set(b1)
    w2p = jnp.zeros((HIDDEN_PAD, HIDDEN_PAD), jnp.float32).at[:HIDDEN, :HIDDEN].set(w2)
    b2p = jnp.zeros((HIDDEN_PAD, 1), jnp.float32).at[:HIDDEN, 0].set(b2)
    w3p = jnp.zeros((ACTIONS_PAD, HIDDEN_PAD), jnp.float32).at[:N_ACTIONS, :HIDDEN].set(w3)
    b3p = jnp.zeros((ACTIONS_PAD, 1), jnp.float32).at[:N_ACTIONS, 0].set(b3)
    return (w1p, b1p, w2p, b2p, w3p, b3p)


def reference_forward(x, params):
    """Pure-JAX reference of the same forward pass (unpadded params)."""
    w1, b1, w2, b2, w3, b3 = params
    hi = jax.lax.Precision.HIGHEST
    h1 = jnp.maximum(jnp.dot(x, w1.T, precision=hi) + b1, 0.0)
    h2 = jnp.maximum(jnp.dot(h1, w2.T, precision=hi) + b2, 0.0)
    return jnp.dot(h2, w3.T, precision=hi) + b3


if __name__ == "__main__":
    key = jax.random.PRNGKey(0)
    kx, kp = jax.random.split(key)

    params = init_params(kp)
    padded_params = pad_params(params)

    # batch=2: act-selection path (single tile).
    # batch=300: non-multiple batch, padded, 3 grid steps at tb=128.
    # batch=512: replay-minibatch-style batch, 2 grid steps at tb=256
    #            (keeps both v7x TensorCores busy).
    for batch in (2, 300, 512):
        x = jax.random.normal(jax.random.fold_in(kx, batch),
                              (batch, N_STATES), jnp.float32)
        out = jax.block_until_ready(q_table_net_forward(x, padded_params))
        ref = reference_forward(x, params)
        assert out.shape == (batch, N_ACTIONS)
        assert jnp.allclose(out, ref, atol=1e-4, rtol=1e-4), (batch, out, ref)

    print("KERNEL_OK")
</pallas_src>

<mosaic_0001>
module attributes {stable_mosaic.version = 11 : i64} {
  func.func @_q_table_net_kernel(%arg0: i32, %arg1: memref<8x128xf32, #tpu.memory_space<vmem>>, %arg2: memref<128x8xf32, #tpu.memory_space<vmem>>, %arg3: memref<128x1xf32, #tpu.memory_space<vmem>>, %arg4: memref<128x128xf32, #tpu.memory_space<vmem>>, %arg5: memref<128x1xf32, #tpu.memory_space<vmem>>, %arg6: memref<8x128xf32, #tpu.memory_space<vmem>>, %arg7: memref<8x1xf32, #tpu.memory_space<vmem>>, %arg8: memref<8x128xf32, #tpu.memory_space<vmem>>) attributes {dimension_semantics = [#tpu.dimension_semantics<parallel>], iteration_bounds = array<i64: 1>, scalar_prefetch = 0 : i64, scratch_operands = 0 : i64, tpu.core_type = #tpu.core_type<tc>, window_params = [{transform_indices = @transform_0, window_bounds = array<i64: 8, 128>}, {pipeline_mode = #tpu.pipeline_mode<synchronous>, transform_indices = @transform_1, window_bounds = array<i64: 128, 8>}, {pipeline_mode = #tpu.pipeline_mode<synchronous>, transform_indices = @transform_2, window_bounds = array<i64: 128, 1>}, {pipeline_mode = #tpu.pipeline_mode<synchronous>, transform_indices = @transform_3, window_bounds = array<i64: 128, 128>}, {pipeline_mode = #tpu.pipeline_mode<synchronous>, transform_indices = @transform_4, window_bounds = array<i64: 128, 1>}, {pipeline_mode = #tpu.pipeline_mode<synchronous>, transform_indices = @transform_5, window_bounds = array<i64: 8, 128>}, {pipeline_mode = #tpu.pipeline_mode<synchronous>, transform_indices = @transform_6, window_bounds = array<i64: 8, 1>}, {transform_indices = @transform_7, window_bounds = array<i64: 8, 128>}]} {
    %c0 = arith.constant 0 : index
    %c0_0 = arith.constant 0 : index
    %0 = vector.load %arg1[%c0, %c0_0] : memref<8x128xf32, #tpu.memory_space<vmem>>, vector<8x128xf32>
    %c0_1 = arith.constant 0 : index
    %c0_2 = arith.constant 0 : index
    %1 = vector.load %arg2[%c0_1, %c0_2] : memref<128x8xf32, #tpu.memory_space<vmem>>, vector<128x8xf32>
    %cst = arith.constant dense<0.000000e+00> : vector<128x128xf32>
    %2 = tpu.matmul %1, %0, %cst {dimension_numbers = #tpu.dot_dimension_numbers<[1], [0], [0], [1], [0, 0, 1, 1], [], []>} : vector<128x8xf32>, vector<8x128xf32>, vector<128x128xf32> -> vector<128x128xf32>
    %c0_3 = arith.constant 0 : index
    %c0_4 = arith.constant 0 : index
    %3 = vector.load %arg3[%c0_3, %c0_4] : memref<128x1xf32, #tpu.memory_space<vmem>>, vector<128x1xf32>
    %4 = vector.broadcast %3 : vector<128x1xf32> to vector<128x128xf32>
    %5 = arith.addf %2, %4 : vector<128x128xf32>
    %cst_5 = arith.constant 0.000000e+00 : f32
    %6 = vector.broadcast %cst_5 : f32 to vector<128x128xf32>
    %7 = arith.maximumf %5, %6 : vector<128x128xf32>
    %c0_6 = arith.constant 0 : index
    %c0_7 = arith.constant 0 : index
    %8 = vector.load %arg4[%c0_6, %c0_7] : memref<128x128xf32, #tpu.memory_space<vmem>>, vector<128x128xf32>
    %cst_8 = arith.constant dense<0.000000e+00> : vector<128x128xf32>
    %9 = tpu.matmul %8, %7, %cst_8 {dimension_numbers = #tpu.dot_dimension_numbers<[1], [0], [0], [1], [0, 0, 1, 1], [], []>} : vector<128x128xf32>, vector<128x128xf32>, vector<128x128xf32> -> vector<128x128xf32>
    %c0_9 = arith.constant 0 : index
    %c0_10 = arith.constant 0 : index
    %10 = vector.load %arg5[%c0_9, %c0_10] : memref<128x1xf32, #tpu.memory_space<vmem>>, vector<128x1xf32>
    %11 = vector.broadcast %10 : vector<128x1xf32> to vector<128x128xf32>
    %12 = arith.addf %9, %11 : vector<128x128xf32>
    %cst_11 = arith.constant 0.000000e+00 : f32
    %13 = vector.broadcast %cst_11 : f32 to vector<128x128xf32>
    %14 = arith.maximumf %12, %13 : vector<128x128xf32>
    %c0_12 = arith.constant 0 : index
    %c0_13 = arith.constant 0 : index
    %15 = vector.load %arg6[%c0_12, %c0_13] : memref<8x128xf32, #tpu.memory_space<vmem>>, vector<8x128xf32>
    %cst_14 = arith.constant dense<0.000000e+00> : vector<8x128xf32>
    %16 = tpu.matmul %15, %14, %cst_14 {dimension_numbers = #tpu.dot_dimension_numbers<[1], [0], [0], [1], [0, 0, 1, 1], [], []>} : vector<8x128xf32>, vector<128x128xf32>, vector<8x128xf32> -> vector<8x128xf32>
    %c0_15 = arith.constant 0 : index
    %c0_16 = arith.constant 0 : index
    %17 = vector.load %arg7[%c0_15, %c0_16] : memref<8x1xf32, #tpu.memory_space<vmem>>, vector<8x1xf32>
    %18 = vector.broadcast %17 : vector<8x1xf32> to vector<8x128xf32>
    %19 = arith.addf %16, %18 : vector<8x128xf32>
    %c0_17 = arith.constant 0 : index
    %c0_18 = arith.constant 0 : index
    %20 = vector.load %arg8[%c0_17, %c0_18] : memref<8x128xf32, #tpu.memory_space<vmem>>, vector<8x128xf32>
    tpu.vector_store %arg8[%c0_17, %c0_18], %19 {strides = array<i32>} : memref<8x128xf32, #tpu.memory_space<vmem>>, vector<8x128xf32>,
    return
  }
  func.func @transform_0(%arg0: i32) -> (i32, i32) {
    %c0_i32 = arith.constant 0 : i32
    %c0_i32_0 = arith.constant 0 : i32
    return %c0_i32, %arg0 : i32, i32
  }
  func.func @transform_1(%arg0: i32) -> (i32, i32) {
    %c0_i32 = arith.constant 0 : i32
    %c0_i32_0 = arith.constant 0 : i32
    %c0_i32_1 = arith.constant 0 : i32
    return %c0_i32, %c0_i32_0 : i32, i32
  }
  func.func @transform_2(%arg0: i32) -> (i32, i32) {
    %c0_i32 = arith.constant 0 : i32
    %c0_i32_0 = arith.constant 0 : i32
    %c0_i32_1 = arith.constant 0 : i32
    return %c0_i32, %c0_i32_0 : i32, i32
  }
  func.func @transform_3(%arg0: i32) -> (i32, i32) {
    %c0_i32 = arith.constant 0 : i32
    %c0_i32_0 = arith.constant 0 : i32
    %c0_i32_1 = arith.constant 0 : i32
    return %c0_i32, %c0_i32_0 : i32, i32
  }
  func.func @transform_4(%arg0: i32) -> (i32, i32) {
    %c0_i32 = arith.constant 0 : i32
    %c0_i32_0 = arith.constant 0 : i32
    %c0_i32_1 = arith.constant 0 : i32
    return %c0_i32, %c0_i32_0 : i32, i32
  }
  func.func @transform_5(%arg0: i32) -> (i32, i32) {
    %c0_i32 = arith.constant 0 : i32
    %c0_i32_0 = arith.constant 0 : i32
    %c0_i32_1 = arith.constant 0 : i32
    return %c0_i32, %c0_i32_0 : i32, i32
  }
  func.func @transform_6(%arg0: i32) -> (i32, i32) {
    %c0_i32 = arith.constant 0 : i32
    %c0_i32_0 = arith.constant 0 : i32
    %c0_i32_1 = arith.constant 0 : i32
    return %c0_i32, %c0_i32_0 : i32, i32
  }
  func.func @transform_7(%arg0: i32) -> (i32, i32) {
    %c0_i32 = arith.constant 0 : i32
    %c0_i32_0 = arith.constant 0 : i32
    return %c0_i32, %arg0 : i32, i32
  }
}

</mosaic_0001>

<llo_original>
// kernel: q_table_net_forward.1
$region0: #{q_table_net_forward.1}
  #allocation0 [shape = 'u32[]', space=smem, size = 0x4, offset = 0x4, fixed_abs, tag = 'smem constant byte address 0x4 - core index']
  #allocation1 [shape = 'u32[144,128]{1,0:T(1,128)}', space=vmem, size = 0x12000, scoped, tag = 'internal scratch']
  %s0 = inlined_call_operand.vmem [shape: f32[8,128], index: 0, kind: input, shape index: {}]
  %s1 = inlined_call_operand.vmem [shape: f32[128,8], index: 1, kind: input, shape index: {}]
  %s2 = inlined_call_operand.vmem [shape: f32[128,1], index: 2, kind: input, shape index: {}]
  %s3 = inlined_call_operand.vmem [shape: f32[128,128], index: 3, kind: input, shape index: {}]
  %s4 = inlined_call_operand.vmem [shape: f32[128,1], index: 4, kind: input, shape index: {}]
  %s5 = inlined_call_operand.vmem [shape: f32[8,128], index: 5, kind: input, shape index: {}]
  %s6 = inlined_call_operand.vmem [shape: f32[8,1], index: 6, kind: input, shape index: {}]
  %s7 = inlined_call_operand.vmem [shape: f32[8,128], index: 7, kind: output, shape index: {}]
  %s8 = sld [smem:[#allocation0]]
  $region38: #{q_table_net_forward.1} parent=0
    _
  %s10 = ssub.s32 1, %s8
  %s11 = scalar_select 0, %s10, %s8
  // Predicated region
  $region2: #{q_table_net_forward.1} parent=0 // pred_check
    _
  $region3: #{q_table_net_forward.1} parent=0 // pred_check_branch
    %13 = sbr.rel (0) target = $region5
  $region4: #{q_table_net_forward.1} parent=0 // pred_region
    _
  $region5: #{q_table_net_forward.1} parent=0 // pred_fallthru
    _
  // Predicated region
  $region6: #{q_table_net_forward.1} parent=0 // pred_check
    _
  $region7: #{q_table_net_forward.1} parent=0 // pred_check_branch
    %15 = sbr.rel (0) target = $region9
  $region8: #{q_table_net_forward.1} parent=0 // pred_region
    _
  $region9: #{q_table_net_forward.1} parent=0 // pred_fallthru
    _
  // Predicated region
  $region10: #{q_table_net_forward.1} parent=0 // pred_check
    _
  $region11: #{q_table_net_forward.1} parent=0 // pred_check_branch
    %17 = sbr.rel (0) target = $region13
  $region12: #{q_table_net_forward.1} parent=0 // pred_region
    _
  $region13: #{q_table_net_forward.1} parent=0 // pred_fallthru
    _
  // Predicated region
  $region14: #{q_table_net_forward.1} parent=0 // pred_check
    _
  $region15: #{q_table_net_forward.1} parent=0 // pred_check_branch
    %19 = sbr.rel (0) target = $region17
  $region16: #{q_table_net_forward.1} parent=0 // pred_region
    _
  $region17: #{q_table_net_forward.1} parent=0 // pred_fallthru
    _
  // Predicated region
  $region18: #{q_table_net_forward.1} parent=0 // pred_check
    _
  $region19: #{q_table_net_forward.1} parent=0 // pred_check_branch
    %21 = sbr.rel (0) target = $region21
  $region20: #{q_table_net_forward.1} parent=0 // pred_region
    _
  $region21: #{q_table_net_forward.1} parent=0 // pred_fallthru
    _
  // Predicated region
  $region22: #{q_table_net_forward.1} parent=0 // pred_check
    _
  $region23: #{q_table_net_forward.1} parent=0 // pred_check_branch
    %23 = sbr.rel (0) target = $region25
  $region24: #{q_table_net_forward.1} parent=0 // pred_region
    _
  $region25: #{q_table_net_forward.1} parent=0 // pred_fallthru
    _
  // Predicated region
  $region26: #{q_table_net_forward.1} parent=0 // pred_check
    _
  $region27: #{q_table_net_forward.1} parent=0 // pred_check_branch
    %25 = sbr.rel (0) target = $region29
  $region28: #{q_table_net_forward.1} parent=0 // pred_region
    _
  $region29: #{q_table_net_forward.1} parent=0 // pred_fallthru
    _
  %v26 = vld [vmem:[%s0] sm:$0xff]
  %v27 = vld [vmem:[%s1] sm:$0xff]
  %v28 = vld [vmem:[%s1 + $0x8] sm:$0xff]
  %v29 = vld [vmem:[%s1 + $0x10] sm:$0xff]
  %v30 = vld [vmem:[%s1 + $0x18] sm:$0xff]
  %v31 = vld [vmem:[%s1 + $0x20] sm:$0xff]
  %v32 = vld [vmem:[%s1 + $0x28] sm:$0xff]
  %v33 = vld [vmem:[%s1 + $0x30] sm:$0xff]
  %v34 = vld [vmem:[%s1 + $0x38] sm:$0xff]
  %v35 = vld [vmem:[%s1 + $0x40] sm:$0xff]
  %v36 = vld [vmem:[%s1 + $0x48] sm:$0xff]
  %v37 = vld [vmem:[%s1 + $0x50] sm:$0xff]
  %v38 = vld [vmem:[%s1 + $0x58] sm:$0xff]
  %v39 = vld [vmem:[%s1 + $0x60] sm:$0xff]
  %v40 = vld [vmem:[%s1 + $0x68] sm:$0xff]
  %v41 = vld [vmem:[%s1 + $0x70] sm:$0xff]
  %v42 = vld [vmem:[%s1 + $0x78] sm:$0xff]
  %v43 = vld [vmem:[%s2] sm:$0xff]
  %v44 = vld [vmem:[%s2 + $0x8] sm:$0xff]
  %v45 = vld [vmem:[%s2 + $0x10] sm:$0xff]
  %v46 = vld [vmem:[%s2 + $0x18] sm:$0xff]
  %v47 = vld [vmem:[%s2 + $0x20] sm:$0xff]
  %v48 = vld [vmem:[%s2 + $0x28] sm:$0xff]
  %v49 = vld [vmem:[%s2 + $0x30] sm:$0xff]
  %v50 = vld [vmem:[%s2 + $0x38] sm:$0xff]
  %v51 = vld [vmem:[%s2 + $0x40] sm:$0xff]
  %v52 = vld [vmem:[%s2 + $0x48] sm:$0xff]
  %v53 = vld [vmem:[%s2 + $0x50] sm:$0xff]
  %v54 = vld [vmem:[%s2 + $0x58] sm:$0xff]
  %v55 = vld [vmem:[%s2 + $0x60] sm:$0xff]
  %v56 = vld [vmem:[%s2 + $0x68] sm:$0xff]
  %v57 = vld [vmem:[%s2 + $0x70] sm:$0xff]
  %v58 = vld [vmem:[%s2 + $0x78] sm:$0xff]
  %60 = vset.pattern.permute.xlu0 0
  %61 = vperm.xlu0 %60, %v43
  %v62 = vpop.permute.xlu0 %61
  %65 = vset.pattern.permute.xlu0 0
  %66 = vperm.xlu0 %65, %v44
  %v67 = vpop.permute.xlu0 %66
  %70 = vset.pattern.permute.xlu0 0
  %71 = vperm.xlu0 %70, %v45
  %v72 = vpop.permute.xlu0 %71
  %75 = vset.pattern.permute.xlu0 0
  %76 = vperm.xlu0 %75, %v46
  %v77 = vpop.permute.xlu0 %76
  %80 = vset.pattern.permute.xlu0 0
  %81 = vperm.xlu0 %80, %v47
  %v82 = vpop.permute.xlu0 %81
  %85 = vset.pattern.permute.xlu0 0
  %86 = vperm.xlu0 %85, %v48
  %v87 = vpop.permute.xlu0 %86
  %90 = vset.pattern.permute.xlu0 0
  %91 = vperm.xlu0 %90, %v49
  %v92 = vpop.permute.xlu0 %91
  %95 = vset.pattern.permute.xlu0 0
  %96 = vperm.xlu0 %95, %v50
  %v97 = vpop.permute.xlu0 %96
  %100 = vset.pattern.permute.xlu0 0
  %101 = vperm.xlu0 %100, %v51
  %v102 = vpop.permute.xlu0 %101
  %105 = vset.pattern.permute.xlu0 0
  %106 = vperm.xlu0 %105, %v52
  %v107 = vpop.permute.xlu0 %106
  %110 = vset.pattern.permute.xlu0 0
  %111 = vperm.xlu0 %110, %v53
  %v112 = vpop.permute.xlu0 %111
  %115 = vset.pattern.permute.xlu0 0
  %116 = vperm.xlu0 %115, %v54
  %v117 = vpop.permute.xlu0 %116
  %120 = vset.pattern.permute.xlu0 0
  %121 = vperm.xlu0 %120, %v55
  %v122 = vpop.permute.xlu0 %121
  %125 = vset.pattern.permute.xlu0 0
  %126 = vperm.xlu0 %125, %v56
  %v127 = vpop.permute.xlu0 %126
  %130 = vset.pattern.permute.xlu0 0
  %131 = vperm.xlu0 %130, %v57
  %v132 = vpop.permute.xlu0 %131
  %135 = vset.pattern.permute.xlu0 0
  %136 = vperm.xlu0 %135, %v58
  %v137 = vpop.permute.xlu0 %136
  %vm139 = vcmask 64512
  %v141 = vsel %vm139, %v27, 0
  %v144 = vsel %vm139, %v28, 0
  %v147 = vsel %vm139, %v29, 0
  %v150 = vsel %vm139, %v30, 0
  %v153 = vsel %vm139, %v31, 0
  %v156 = vsel %vm139, %v32, 0
  %v159 = vsel %vm139, %v33, 0
  %v162 = vsel %vm139, %v34, 0
  %v165 = vsel %vm139, %v35, 0
  %v168 = vsel %vm139, %v36, 0
  %v171 = vsel %vm139, %v37, 0
  %v174 = vsel %vm139, %v38, 0
  %v177 = vsel %vm139, %v39, 0
  %v180 = vsel %vm139, %v40, 0
  %v183 = vsel %vm139, %v41, 0
  %v186 = vsel %vm139, %v42, 0
  %188 = vmatprep.subr.mxu0 0.0
  %189 = vmatpush1.msra.mxu0 %v26
  %190 = vmatprep.subr.mxu0 0.0
  %191 = vmatpush1.msra.mxu0 0.0
  %192 = vmatprep.subr.mxu0 0.0
  %193 = vmatpush1.msra.mxu0 0.0
  %194 = vmatprep.subr.mxu0 0.0
  %195 = vmatpush1.msra.mxu0 0.0
  %196 = vmatprep.subr.mxu0 0.0
  %197 = vmatpush1.msra.mxu0 0.0
  %198 = vmatprep.subr.mxu0 0.0
  %199 = vmatpush1.msra.mxu0 0.0
  %200 = vmatprep.subr.mxu0 0.0
  %201 = vmatpush1.msra.mxu0 0.0
  %202 = vmatprep.subr.mxu0 0.0
  %203 = vmatpush1.msra.mxu0 0.0
  %204 = vmatprep.subr.mxu0 0.0
  %205 = vmatpush1.msra.mxu0 0.0
  %206 = vmatprep.subr.mxu0 0.0
  %207 = vmatpush1.msra.mxu0 0.0
  %208 = vmatprep.subr.mxu0 0.0
  %209 = vmatpush1.msra.mxu0 0.0
  %210 = vmatprep.subr.mxu0 0.0
  %211 = vmatpush1.msra.mxu0 0.0
  %212 = vmatprep.subr.mxu0 0.0
  %213 = vmatpush1.msra.mxu0 0.0
  %214 = vmatprep.subr.mxu0 0.0
  %215 = vmatpush1.msra.mxu0 0.0
  %216 = vmatprep.subr.mxu0 0.0
  %217 = vmatpush1.msra.mxu0 0.0
  %218 = vmatprep.subr.mxu0 0.0
  %219 = vmatpush1.msra.mxu0 0.0
  %220 = vmatprep.subr.mxu0 0.0
  %221 = vmatpush1.msra.mxu0 0.0
  %222 = vmatprep.subr.mxu0 0.0
  %223 = vmatpush1.msra.mxu0 0.0
  %224 = vmatprep.subr.mxu0 0.0
  %225 = vmatpush1.msra.mxu0 0.0
  %226 = vmatprep.subr.mxu0 0.0
  %227 = vmatpush1.msra.mxu0 0.0
  %228 = vmatprep.subr.mxu0 0.0
  %229 = vmatpush1.msra.mxu0 0.0
  %230 = vmatprep.subr.mxu0 0.0
  %231 = vmatpush1.msra.mxu0 0.0
  %232 = vmatprep.subr.mxu0 0.0
  %233 = vmatpush1.msra.mxu0 0.0
  %234 = vmatprep.subr.mxu0 0.0
  %235 = vmatpush1.msra.mxu0 0.0
  %236 = vmatprep.subr.mxu0 0.0
  %237 = vmatpush1.msra.mxu0 0.0
  %238 = vmatprep.subr.mxu0 0.0
  %239 = vmatpush1.msra.mxu0 0.0
  %240 = vmatprep.subr.mxu0 0.0
  %241 = vmatpush1.msra.mxu0 0.0
  %242 = vmatprep.subr.mxu0 0.0
  %243 = vmatpush1.msra.mxu0 0.0
  %244 = vmatprep.subr.mxu0 0.0
  %245 = vmatpush1.msra.mxu0 0.0
  %246 = vmatprep.subr.mxu0 0.0
  %247 = vmatpush1.msra.mxu0 0.0
  %248 = vmatprep.subr.mxu0 0.0
  %249 = vmatpush1.msra.mxu0 0.0
  %250 = vmatprep.subr.mxu0 0.0
  %251 = vmatpush1.msra.mxu0 0.0
  %252 = vmatprep.mubr.f32.mxu0 0.0
  %253 = vmatmul.mubr.f32.gmra.mrb[0].mxu0 %v141
  %v254 = vpop.f32.mrb[0].mxu0
  %v255 = vadd.f32 %v62, %v254
  %v256 = vpop.f32.mrb[0].mxu0
  %257 = vmatprep.mubr.f32.mxu0 0.0
  %258 = vmatmul.mubr.f32.gmra.mrb[0].mxu0 %v144
  %v259 = vpop.f32.mrb[0].mxu0
  %v260 = vadd.f32 %v67, %v259
  %v261 = vpop.f32.mrb[0].mxu0
  %262 = vmatprep.mubr.f32.mxu0 0.0
  %263 = vmatmul.mubr.f32.gmra.mrb[0].mxu0 %v147
  %v264 = vpop.f32.mrb[0].mxu0
  %v265 = vadd.f32 %v72, %v264
  %v266 = vpop.f32.mrb[0].mxu0
  %267 = vmatprep.mubr.f32.mxu0 0.0
  %268 = vmatmul.mubr.f32.gmra.mrb[0].mxu0 %v150
  %v269 = vpop.f32.mrb[0].mxu0
  %v270 = vadd.f32 %v77, %v269
  %v271 = vpop.f32.mrb[0].mxu0
  %272 = vmatprep.mubr.f32.mxu0 0.0
  %273 = vmatmul.mubr.f32.gmra.mrb[0].mxu0 %v153
  %v274 = vpop.f32.mrb[0].mxu0
  %v275 = vadd.f32 %v82, %v274
  %v276 = vpop.f32.mrb[0].mxu0
  %277 = vmatprep.mubr.f32.mxu0 0.0
  %278 = vmatmul.mubr.f32.gmra.mrb[0].mxu0 %v156
  %v279 = vpop.f32.mrb[0].mxu0
  %v280 = vadd.f32 %v87, %v279
  %v281 = vpop.f32.mrb[0].mxu0
  %282 = vmatprep.mubr.f32.mxu0 0.0
  %283 = vmatmul.mubr.f32.gmra.mrb[0].mxu0 %v159
  %v284 = vpop.f32.mrb[0].mxu0
  %v285 = vadd.f32 %v92, %v284
  %v286 = vpop.f32.mrb[0].mxu0
  %287 = vmatprep.mubr.f32.mxu0 0.0
  %288 = vmatmul.mubr.f32.gmra.mrb[0].mxu0 %v162
  %v289 = vpop.f32.mrb[0].mxu0
  %v290 = vadd.f32 %v97, %v289
  %v291 = vpop.f32.mrb[0].mxu0
  %292 = vmatprep.mubr.f32.mxu0 0.0
  %293 = vmatmul.mubr.f32.gmra.mrb[0].mxu0 %v165
  %v294 = vpop.f32.mrb[0].mxu0
  %v295 = vadd.f32 %v102, %v294
  %v296 = vpop.f32.mrb[0].mxu0
  %297 = vmatprep.mubr.f32.mxu0 0.0
  %298 = vmatmul.mubr.f32.gmra.mrb[0].mxu0 %v168
  %v299 = vpop.f32.mrb[0].mxu0
  %v300 = vadd.f32 %v107, %v299
  %v301 = vpop.f32.mrb[0].mxu0
  %302 = vmatprep.mubr.f32.mxu0 0.0
  %303 = vmatmul.mubr.f32.gmra.mrb[0].mxu0 %v171
  %v304 = vpop.f32.mrb[0].mxu0
  %v305 = vadd.f32 %v112, %v304
  %v306 = vpop.f32.mrb[0].mxu0
  %307 = vmatprep.mubr.f32.mxu0 0.0
  %308 = vmatmul.mubr.f32.gmra.mrb[0].mxu0 %v174
  %v309 = vpop.f32.mrb[0].mxu0
  %v310 = vadd.f32 %v117, %v309
  %v311 = vpop.f32.mrb[0].mxu0
  %312 = vmatprep.mubr.f32.mxu0 0.0
  %313 = vmatmul.mubr.f32.gmra.mrb[0].mxu0 %v177
  %v314 = vpop.f32.mrb[0].mxu0
  %v315 = vadd.f32 %v122, %v314
  %v316 = vpop.f32.mrb[0].mxu0
  %317 = vmatprep.mubr.f32.mxu0 0.0
  %318 = vmatmul.mubr.f32.gmra.mrb[0].mxu0 %v180
  %v319 = vpop.f32.mrb[0].mxu0
  %v320 = vadd.f32 %v127, %v319
  %v321 = vpop.f32.mrb[0].mxu0
  %322 = vmatprep.mubr.f32.mxu0 0.0
  %323 = vmatmul.mubr.f32.gmra.mrb[0].mxu0 %v183
  %v324 = vpop.f32.mrb[0].mxu0
  %v325 = vadd.f32 %v132, %v324
  %v326 = vpop.f32.mrb[0].mxu0
  %327 = vmatprep.mubr.f32.mxu0 0.0
  %328 = vmatmul.mubr.f32.gmra.mrb[0].mxu0 %v186
  %v329 = vpop.f32.mrb[0].mxu0
  %v330 = vadd.f32 %v137, %v329
  %v331 = vpop.f32.mrb[0].mxu0
  %332 = vdwg.mxu0
  %v333 = vmax.f32 %v255, 0.0
  %v334 = vmax.f32 %v260, 0.0
  %v335 = vmax.f32 %v265, 0.0
  %v336 = vmax.f32 %v270, 0.0
  %v337 = vmax.f32 %v275, 0.0
  %v338 = vmax.f32 %v280, 0.0
  %v339 = vmax.f32 %v285, 0.0
  %v340 = vmax.f32 %v290, 0.0
  %v341 = vmax.f32 %v295, 0.0
  %v342 = vmax.f32 %v300, 0.0
  %v343 = vmax.f32 %v305, 0.0
  %v344 = vmax.f32 %v310, 0.0
  %v345 = vmax.f32 %v315, 0.0
  %v346 = vmax.f32 %v320, 0.0
  %v347 = vmax.f32 %v325, 0.0
  %v348 = vmax.f32 %v330, 0.0
  %v349 = vld [vmem:[%s3] sm:$0xff]
  %v350 = vld [vmem:[%s3 + $0x8] sm:$0xff]
  %v351 = vld [vmem:[%s3 + $0x10] sm:$0xff]
  %v352 = vld [vmem:[%s3 + $0x18] sm:$0xff]
  %v353 = vld [vmem:[%s3 + $0x20] sm:$0xff]
  %v354 = vld [vmem:[%s3 + $0x28] sm:$0xff]
  %v355 = vld [vmem:[%s3 + $0x30] sm:$0xff]
  %v356 = vld [vmem:[%s3 + $0x38] sm:$0xff]
  %v357 = vld [vmem:[%s3 + $0x40] sm:$0xff]
  %v358 = vld [vmem:[%s3 + $0x48] sm:$0xff]
  %v359 = vld [vmem:[%s3 + $0x50] sm:$0xff]
  %v360 = vld [vmem:[%s3 + $0x58] sm:$0xff]
  %v361 = vld [vmem:[%s3 + $0x60] sm:$0xff]
  %v362 = vld [vmem:[%s3 + $0x68] sm:$0xff]
  %v363 = vld [vmem:[%s3 + $0x70] sm:$0xff]
  %v364 = vld [vmem:[%s3 + $0x78] sm:$0xff]
  %v365 = vld [vmem:[%s4] sm:$0xff]
  %v366 = vld [vmem:[%s4 + $0x8] sm:$0xff]
  %v367 = vld [vmem:[%s4 + $0x10] sm:$0xff]
  %v368 = vld [vmem:[%s4 + $0x18] sm:$0xff]
  %v369 = vld [vmem:[%s4 + $0x20] sm:$0xff]
  %v370 = vld [vmem:[%s4 + $0x28] sm:$0xff]
  %v371 = vld [vmem:[%s4 + $0x30] sm:$0xff]
  %v372 = vld [vmem:[%s4 + $0x38] sm:$0xff]
  %v373 = vld [vmem:[%s4 + $0x40] sm:$0xff]
  %v374 = vld [vmem:[%s4 + $0x48] sm:$0xff]
  %v375 = vld [vmem:[%s4 + $0x50] sm:$0xff]
  %v376 = vld [vmem:[%s4 + $0x58] sm:$0xff]
  %v377 = vld [vmem:[%s4 + $0x60] sm:$0xff]
  %v378 = vld [vmem:[%s4 + $0x68] sm:$0xff]
  %v379 = vld [vmem:[%s4 + $0x70] sm:$0xff]
  %v380 = vld [vmem:[%s4 + $0x78] sm:$0xff]
  %382 = vset.pattern.permute.xlu0 0
  %383 = vperm.xlu0 %382, %v365
  %v384 = vpop.permute.xlu0 %383
  %387 = vset.pattern.permute.xlu0 0
  %388 = vperm.xlu0 %387, %v366
  %v389 = vpop.permute.xlu0 %388
  %392 = vset.pattern.permute.xlu0 0
  %393 = vperm.xlu0 %392, %v367
  %v394 = vpop.permute.xlu0 %393
  %397 = vset.pattern.permute.xlu0 0
  %398 = vperm.xlu0 %397, %v368
  %v399 = vpop.permute.xlu0 %398
  %402 = vset.pattern.permute.xlu0 0
  %403 = vperm.xlu0 %402, %v369
  %v404 = vpop.permute.xlu0 %403
  %407 = vset.pattern.permute.xlu0 0
  %408 = vperm.xlu0 %407, %v370
  %v409 = vpop.permute.xlu0 %408
  %412 = vset.pattern.permute.xlu0 0
  %413 = vperm.xlu0 %412, %v371
  %v414 = vpop.permute.xlu0 %413
  %417 = vset.pattern.permute.xlu0 0
  %418 = vperm.xlu0 %417, %v372
  %v419 = vpop.permute.xlu0 %418
  %422 = vset.pattern.permute.xlu0 0
  %423 = vperm.xlu0 %422, %v373
  %v424 = vpop.permute.xlu0 %423
  %427 = vset.pattern.permute.xlu0 0
  %428 = vperm.xlu0 %427, %v374
  %v429 = vpop.permute.xlu0 %428
  %432 = vset.pattern.permute.xlu0 0
  %433 = vperm.xlu0 %432, %v375
  %v434 = vpop.permute.xlu0 %433
  %437 = vset.pattern.permute.xlu0 0
  %438 = vperm.xlu0 %437, %v376
  %v439 = vpop.permute.xlu0 %438
  %442 = vset.pattern.permute.xlu0 0
  %443 = vperm.xlu0 %442, %v377
  %v444 = vpop.permute.xlu0 %443
  %447 = vset.pattern.permute.xlu0 0
  %448 = vperm.xlu0 %447, %v378
  %v449 = vpop.permute.xlu0 %448
  %452 = vset.pattern.permute.xlu0 0
  %453 = vperm.xlu0 %452, %v379
  %v454 = vpop.permute.xlu0 %453
  %457 = vset.pattern.permute.xlu0 0
  %458 = vperm.xlu0 %457, %v380
  %v459 = vpop.permute.xlu0 %458
  %461 = vmatprep.subr.mxu0 0.0
  %462 = vmatpush1.msra.mxu0 %v333
  %463 = vmatprep.subr.mxu0 0.0
  %464 = vmatpush1.msra.mxu0 %v334
  %465 = vmatprep.subr.mxu0 0.0
  %466 = vmatpush1.msra.mxu0 %v335
  %467 = vmatprep.subr.mxu0 0.0
  %468 = vmatpush1.msra.mxu0 %v336
  %469 = vmatprep.subr.mxu0 0.0
  %470 = vmatpush1.msra.mxu0 %v337
  %471 = vmatprep.subr.mxu0 0.0
  %472 = vmatpush1.msra.mxu0 %v338
  %473 = vmatprep.subr.mxu0 0.0
  %474 = vmatpush1.msra.mxu0 %v339
  %475 = vmatprep.subr.mxu0 0.0
  %476 = vmatpush1.msra.mxu0 %v340
  %477 = vmatprep.subr.mxu0 0.0
  %478 = vmatpush1.msra.mxu0 %v341
  %479 = vmatprep.subr.mxu0 0.0
  %480 = vmatpush1.msra.mxu0 %v342
  %481 = vmatprep.subr.mxu0 0.0
  %482 = vmatpush1.msra.mxu0 %v343
  %483 = vmatprep.subr.mxu0 0.0
  %484 = vmatpush1.msra.mxu0 %v344
  %485 = vmatprep.subr.mxu0 0.0
  %486 = vmatpush1.msra.mxu0 %v345
  %487 = vmatprep.subr.mxu0 0.0
  %488 = vmatpush1.msra.mxu0 %v346
  %489 = vmatprep.subr.mxu0 0.0
  %490 = vmatpush1.msra.mxu0 %v347
  %491 = vmatprep.subr.mxu0 0.0
  %492 = vmatpush1.msra.mxu0 %v348
  %493 = vmatprep.subr.mxu0 0.0
  %494 = vmatpush1.msra.mxu0 0.0
  %495 = vmatprep.subr.mxu0 0.0
  %496 = vmatpush1.msra.mxu0 0.0
  %497 = vmatprep.subr.mxu0 0.0
  %498 = vmatpush1.msra.mxu0 0.0
  %499 = vmatprep.subr.mxu0 0.0
  %500 = vmatpush1.msra.mxu0 0.0
  %501 = vmatprep.subr.mxu0 0.0
  %502 = vmatpush1.msra.mxu0 0.0
  %503 = vmatprep.subr.mxu0 0.0
  %504 = vmatpush1.msra.mxu0 0.0
  %505 = vmatprep.subr.mxu0 0.0
  %506 = vmatpush1.msra.mxu0 0.0
  %507 = vmatprep.subr.mxu0 0.0
  %508 = vmatpush1.msra.mxu0 0.0
  %509 = vmatprep.subr.mxu0 0.0
  %510 = vmatpush1.msra.mxu0 0.0
  %511 = vmatprep.subr.mxu0 0.0
  %512 = vmatpush1.msra.mxu0 0.0
  %513 = vmatprep.subr.mxu0 0.0
  %514 = vmatpush1.msra.mxu0 0.0
  %515 = vmatprep.subr.mxu0 0.0
  %516 = vmatpush1.msra.mxu0 0.0
  %517 = vmatprep.subr.mxu0 0.0
  %518 = vmatpush1.msra.mxu0 0.0
  %519 = vmatprep.subr.mxu0 0.0
  %520 = vmatpush1.msra.mxu0 0.0
  %521 = vmatprep.subr.mxu0 0.0
  %522 = vmatpush1.msra.mxu0 0.0
  %523 = vmatprep.subr.mxu0 0.0
  %524 = vmatpush1.msra.mxu0 0.0
  %525 = vmatprep.mubr.f32.mxu0 0.0
  %526 = vmatmul.mubr.f32.gmra.mrb[0].mxu0 %v349
  %v527 = vpop.f32.mrb[0].mxu0
  %v528 = vadd.f32 %v384, %v527
  %v529 = vpop.f32.mrb[0].mxu0
  %530 = vmatprep.mubr.f32.mxu0 0.0
  %531 = vmatmul.mubr.f32.gmra.mrb[0].mxu0 %v350
  %v532 = vpop.f32.mrb[0].mxu0
  %v533 = vadd.f32 %v389, %v532
  %v534 = vpop.f32.mrb[0].mxu0
  %535 = vmatprep.mubr.f32.mxu0 0.0
  %536 = vmatmul.mubr.f32.gmra.mrb[0].mxu0 %v351
  %v537 = vpop.f32.mrb[0].mxu0
  %v538 = vadd.f32 %v394, %v537
  %v539 = vpop.f32.mrb[0].mxu0
  %540 = vmatprep.mubr.f32.mxu0 0.0
  %541 = vmatmul.mubr.f32.gmra.mrb[0].mxu0 %v352
  %v542 = vpop.f32.mrb[0].mxu0
  %v543 = vadd.f32 %v399, %v542
  %v544 = vpop.f32.mrb[0].mxu0
  %545 = vmatprep.mubr.f32.mxu0 0.0
  %546 = vmatmul.mubr.f32.gmra.mrb[0].mxu0 %v353
  %v547 = vpop.f32.mrb[0].mxu0
  %v548 = vadd.f32 %v404, %v547
  %v549 = vpop.f32.mrb[0].mxu0
  %550 = vmatprep.mubr.f32.mxu0 0.0
  %551 = vmatmul.mubr.f32.gmra.mrb[0].mxu0 %v354
  %v552 = vpop.f32.mrb[0].mxu0
  %v553 = vadd.f32 %v409, %v552
  %v554 = vpop.f32.mrb[0].mxu0
  %555 = vmatprep.mubr.f32.mxu0 0.0
  %556 = vmatmul.mubr.f32.gmra.mrb[0].mxu0 %v355
  %v557 = vpop.f32.mrb[0].mxu0
  %v558 = vadd.f32 %v414, %v557
  %v559 = vpop.f32.mrb[0].mxu0
  %560 = vmatprep.mubr.f32.mxu0 0.0
  %561 = vmatmul.mubr.f32.gmra.mrb[0].mxu0 %v356
  %v562 = vpop.f32.mrb[0].mxu0
  %v563 = vadd.f32 %v419, %v562
  %v564 = vpop.f32.mrb[0].mxu0
  %565 = vmatprep.mubr.f32.mxu0 0.0
  %566 = vmatmul.mubr.f32.gmra.mrb[0].mxu0 %v357
  %v567 = vpop.f32.mrb[0].mxu0
  %v568 = vadd.f32 %v424, %v567
  %v569 = vpop.f32.mrb[0].mxu0
  %570 = vmatprep.mubr.f32.mxu0 0.0
  %571 = vmatmul.mubr.f32.gmra.mrb[0].mxu0 %v358
  %v572 = vpop.f32.mrb[0].mxu0
  %v573 = vadd.f32 %v429, %v572
  %v574 = vpop.f32.mrb[0].mxu0
  %575 = vmatprep.mubr.f32.mxu0 0.0
  %576 = vmatmul.mubr.f32.gmra.mrb[0].mxu0 %v359
  %v577 = vpop.f32.mrb[0].mxu0
  %v578 = vadd.f32 %v434, %v577
  %v579 = vpop.f32.mrb[0].mxu0
  %580 = vmatprep.mubr.f32.mxu0 0.0
  %581 = vmatmul.mubr.f32.gmra.mrb[0].mxu0 %v360
  %v582 = vpop.f32.mrb[0].mxu0
  %v583 = vadd.f32 %v439, %v582
  %v584 = vpop.f32.mrb[0].mxu0
  %585 = vmatprep.mubr.f32.mxu0 0.0
  %586 = vmatmul.mubr.f32.gmra.mrb[0].mxu0 %v361
  %v587 = vpop.f32.mrb[0].mxu0
  %v588 = vadd.f32 %v444, %v587
  %v589 = vpop.f32.mrb[0].mxu0
  %590 = vmatprep.mubr.f32.mxu0 0.0
  %591 = vmatmul.mubr.f32.gmra.mrb[0].mxu0 %v362
  %v592 = vpop.f32.mrb[0].mxu0
  %v593 = vadd.f32 %v449, %v592
  %v594 = vpop.f32.mrb[0].mxu0
  %595 = vmatprep.mubr.f32.mxu0 0.0
  %596 = vmatmul.mubr.f32.gmra.mrb[0].mxu0 %v363
  %v597 = vpop.f32.mrb[0].mxu0
  %v598 = vadd.f32 %v454, %v597
  %v599 = vpop.f32.mrb[0].mxu0
  %600 = vmatprep.mubr.f32.mxu0 0.0
  %601 = vmatmul.mubr.f32.gmra.mrb[0].mxu0 %v364
  %v602 = vpop.f32.mrb[0].mxu0
  %v603 = vadd.f32 %v459, %v602
  %v604 = vpop.f32.mrb[0].mxu0
  %605 = vdwg.mxu0
  %v606 = vmax.f32 %v528, 0.0
  %v607 = vmax.f32 %v533, 0.0
  %v608 = vmax.f32 %v538, 0.0
  %v609 = vmax.f32 %v543, 0.0
  %v610 = vmax.f32 %v548, 0.0
  %v611 = vmax.f32 %v553, 0.0
  %v612 = vmax.f32 %v558, 0.0
  %v613 = vmax.f32 %v563, 0.0
  %v614 = vmax.f32 %v568, 0.0
  %v615 = vmax.f32 %v573, 0.0
  %v616 = vmax.f32 %v578, 0.0
  %v617 = vmax.f32 %v583, 0.0
  %v618 = vmax.f32 %v588, 0.0
  %v619 = vmax.f32 %v593, 0.0
  %v620 = vmax.f32 %v598, 0.0
  %v621 = vmax.f32 %v603, 0.0
  %v622 = vld [vmem:[%s5] sm:$0xff]
  %v623 = vld [vmem:[%s6] sm:$0xff]
  %625 = vset.pattern.permute.xlu0 0
  %626 = vperm.xlu0 %625, %v623
  %v627 = vpop.permute.xlu0 %626
  %629 = vmatprep.subr.mxu0 0.0
  %630 = vmatpush1.msra.mxu0 %v606
  %631 = vmatprep.subr.mxu0 0.0
  %632 = vmatpush1.msra.mxu0 %v607
  %633 = vmatprep.subr.mxu0 0.0
  %634 = vmatpush1.msra.mxu0 %v608
  %635 = vmatprep.subr.mxu0 0.0
  %636 = vmatpush1.msra.mxu0 %v609
  %637 = vmatprep.subr.mxu0 0.0
  %638 = vmatpush1.msra.mxu0 %v610
  %639 = vmatprep.subr.mxu0 0.0
  %640 = vmatpush1.msra.mxu0 %v611
  %641 = vmatprep.subr.mxu0 0.0
  %642 = vmatpush1.msra.mxu0 %v612
  %643 = vmatprep.subr.mxu0 0.0
  %644 = vmatpush1.msra.mxu0 %v613
  %645 = vmatprep.subr.mxu0 0.0
  %646 = vmatpush1.msra.mxu0 %v614
  %647 = vmatprep.subr.mxu0 0.0
  %648 = vmatpush1.msra.mxu0 %v615
  %649 = vmatprep.subr.mxu0 0.0
  %650 = vmatpush1.msra.mxu0 %v616
  %651 = vmatprep.subr.mxu0 0.0
  %652 = vmatpush1.msra.mxu0 %v617
  %653 = vmatprep.subr.mxu0 0.0
  %654 = vmatpush1.msra.mxu0 %v618
  %655 = vmatprep.subr.mxu0 0.0
  %656 = vmatpush1.msra.mxu0 %v619
  %657 = vmatprep.subr.mxu0 0.0
  %658 = vmatpush1.msra.mxu0 %v620
  %659 = vmatprep.subr.mxu0 0.0
  %660 = vmatpush1.msra.mxu0 %v621
  %661 = vmatprep.subr.mxu0 0.0
  %662 = vmatpush1.msra.mxu0 0.0
  %663 = vmatprep.subr.mxu0 0.0
  %664 = vmatpush1.msra.mxu0 0.0
  %665 = vmatprep.subr.mxu0 0.0
  %666 = vmatpush1.msra.mxu0 0.0
  %667 = vmatprep.subr.mxu0 0.0
  %668 = vmatpush1.msra.mxu0 0.0
  %669 = vmatprep.subr.mxu0 0.0
  %670 = vmatpush1.msra.mxu0 0.0
  %671 = vmatprep.subr.mxu0 0.0
  %672 = vmatpush1.msra.mxu0 0.0
  %673 = vmatprep.subr.mxu0 0.0
  %674 = vmatpush1.msra.mxu0 0.0
  %675 = vmatprep.subr.mxu0 0.0
  %676 = vmatpush1.msra.mxu0 0.0
  %677 = vmatprep.subr.mxu0 0.0
  %678 = vmatpush1.msra.mxu0 0.0
  %679 = vmatprep.subr.mxu0 0.0
  %680 = vmatpush1.msra.mxu0 0.0
  %681 = vmatprep.subr.mxu0 0.0
  %682 = vmatpush1.msra.mxu0 0.0
  %683 = vmatprep.subr.mxu0 0.0
  %684 = vmatpush1.msra.mxu0 0.0
  %685 = vmatprep.subr.mxu0 0.0
  %686 = vmatpush1.msra.mxu0 0.0
  %687 = vmatprep.subr.mxu0 0.0
  %688 = vmatpush1.msra.mxu0 0.0
  %689 = vmatprep.subr.mxu0 0.0
  %690 = vmatpush1.msra.mxu0 0.0
  %691 = vmatprep.subr.mxu0 0.0
  %692 = vmatpush1.msra.mxu0 0.0
  %693 = vmatprep.mubr.f32.mxu0 0.0
  %694 = vmatmul.mubr.f32.gmra.mrb[0].mxu0 %v622
  %v695 = vpop.f32.mrb[0].mxu0
  %v696 = vadd.f32 %v627, %v695
  %v697 = vpop.f32.mrb[0].mxu0
  %698 = vdwg.mxu0
  %699 = vst [vmem:[%s7] sm:$0xff] %v696
  // Predicated region
  $region30: #{q_table_net_forward.1} parent=0 // pred_check
    _
  $region31: #{q_table_net_forward.1} parent=0 // pred_check_branch
    %701 = sbr.rel (0) target = $region33
  $region32: #{q_table_net_forward.1} parent=0 // pred_region
    _
  $region33: #{q_table_net_forward.1} parent=0 // pred_fallthru
    _
  // Predicated region
  $region34: #{q_table_net_forward.1} parent=0 // pred_check
    _
  $region35: #{q_table_net_forward.1} parent=0 // pred_check_branch
    %703 = sbr.rel (0) target = $region37
  $region36: #{q_table_net_forward.1} parent=0 // pred_region
    _
  $region37: #{q_table_net_forward.1} parent=0 // pred_fallthru
    _

</llo_original>
